<compile_context>
chip_gen: v6e
topology: v6e:2x2x1
jax: 0.10.0
libtpu: 0.0.40
codegen_flags: <defaults>
</compile_context>

<pallas_src>
import functools

import jax
import jax.numpy as jnp
from jax.experimental import pallas as pl
from jax.experimental.pallas import tpu as pltpu

LANE = 128  # full vreg lane width -> unmasked vld/vst


def _mul2_kernel(x_ref, o_ref):
    # Elementwise hot path on the VPU: one lane-dense tile per grid step.
    o_ref[...] = x_ref[...] * 2


def _device_kind():
    try:
        return jax.devices()[0].device_kind.lower()
    except Exception:
        return ""


def _target_block_bytes(kind):
    if "v7" in kind or "tpu7" in kind:
        return 8 << 20   # ~3.2 TB/s HBM: amortize the ~0.35us per-step overhead
    if "v6" in kind:
        return 4 << 20   # knee of the measured f32 roofline curve on v6e
    return 2 << 20       # v5e & older: per-step overhead already small at 2 MiB


def _build_call(rows, tr, dtype, semantics_key, vmem_limit, alias):
    if semantics_key == "core_parallel":
        semantics = (pltpu.CORE_PARALLEL,)
    else:
        semantics = ("parallel",)
    itemsize = jnp.dtype(dtype).itemsize
    kwargs = dict(
        out_shape=jax.ShapeDtypeStruct((rows, LANE), dtype),
        grid=(pl.cdiv(rows, tr),),
        in_specs=[pl.BlockSpec((tr, LANE), lambda i: (i, 0))],
        out_specs=pl.BlockSpec((tr, LANE), lambda i: (i, 0)),
        compiler_params=pltpu.CompilerParams(
            dimension_semantics=semantics,
            vmem_limit_bytes=vmem_limit,
        ),
        cost_estimate=pl.CostEstimate(
            flops=rows * LANE,
            transcendentals=0,
            bytes_accessed=2 * rows * LANE * itemsize,
        ),
    )
    if alias:
        # Padded temp is kernel-private -> reuse its HBM buffer for the output.
        kwargs["input_output_aliases"] = {0: 0}
    return pl.pallas_call(_mul2_kernel, **kwargs)


@functools.partial(jax.jit, static_argnames=("tr", "semantics_key", "vmem_limit"))
def _mul2_jit(x, *, tr, semantics_key, vmem_limit):
    orig_shape = x.shape
    n = x.size
    rows = pl.cdiv(n, LANE)
    pad = rows * LANE - n          # < 128 elements; 0 in the common case
    flat = x.reshape(-1)           # free under jit (bitcast of contiguous data)
    if pad:
        flat = jnp.pad(flat, (0, pad))
    x2d = flat.reshape(rows, LANE)
    out2d = _build_call(rows, tr, x.dtype, semantics_key, vmem_limit,
                        alias=bool(pad))(x2d)
    out_flat = out2d.reshape(-1)
    if pad:
        out_flat = out_flat[:n]
    return out_flat.reshape(orig_shape)


def mul2(x):
    n = int(x.size)
    if n == 0:
        return x
    itemsize = jnp.dtype(x.dtype).itemsize
    pack = max(8, 32 // itemsize)              # sublane packing: 8 f32 / 16 bf16 / 32 i8
    rows = pl.cdiv(n, LANE)
    kind = _device_kind()

    # Byte-based row tile, rounded to the dtype packing.
    tr = (_target_block_bytes(kind) // (LANE * itemsize)) // pack * pack
    tr = max(pack, tr)
    if rows <= tr:
        tr = rows                               # single full-extent block (always legal)
    grid_len = pl.cdiv(rows, tr)

    # 2 arrays x 2 pipeline buffers + headroom; stays below physical VMEM everywhere.
    vmem_limit = int(min(56 << 20, 4 * tr * LANE * itemsize + (16 << 20)))

    semantics_key = "parallel"
    if ("v7" in kind or "tpu7" in kind) and grid_len >= 2:
        semantics_key = "core_parallel"         # shard the stream across both TCs

    try:
        return _mul2_jit(x, tr=tr, semantics_key=semantics_key,
                         vmem_limit=vmem_limit)
    except Exception:
        if semantics_key == "parallel":
            raise
        # Fallback if CORE_PARALLEL lowering is rejected on this toolchain.
        return _mul2_jit(x, tr=tr, semantics_key="parallel",
                         vmem_limit=vmem_limit)


if __name__ == "__main__":
    key = jax.random.PRNGKey(0)
    x = jax.random.normal(key, (2, 4, 16, 16), dtype=jnp.float32)

    out = mul2(x)
    jax.block_until_ready(out)

    expected = x * 2
    assert out.shape == expected.shape
    assert out.dtype == expected.dtype
    assert jnp.allclose(out, expected), "mismatch vs reference"

    print("KERNEL_OK")
</pallas_src>

<mosaic_0001>
module attributes {stable_mosaic.version = 11 : i64} {
  func.func @_mul2_kernel(%arg0: i32, %arg1: memref<16x128xf32, #tpu.memory_space<vmem>>, %arg2: memref<16x128xf32, #tpu.memory_space<vmem>>) attributes {dimension_semantics = [#tpu.dimension_semantics<parallel>], iteration_bounds = array<i64: 1>, scalar_prefetch = 0 : i64, scratch_operands = 0 : i64, tpu.core_type = #tpu.core_type<tc>, window_params = [{transform_indices = @transform_0, window_bounds = array<i64: 16, 128>}, {transform_indices = @transform_1, window_bounds = array<i64: 16, 128>}]} {
    %c0 = arith.constant 0 : index
    %c0_0 = arith.constant 0 : index
    %0 = vector.load %arg1[%c0, %c0_0] : memref<16x128xf32, #tpu.memory_space<vmem>>, vector<16x128xf32>
    %cst = arith.constant 2.000000e+00 : f32
    %1 = vector.broadcast %cst : f32 to vector<16x128xf32>
    %2 = arith.mulf %0, %1 : vector<16x128xf32>
    %c0_1 = arith.constant 0 : index
    %c0_2 = arith.constant 0 : index
    %3 = vector.load %arg2[%c0_1, %c0_2] : memref<16x128xf32, #tpu.memory_space<vmem>>, vector<16x128xf32>
    tpu.vector_store %arg2[%c0_1, %c0_2], %2 {strides = array<i32>} : memref<16x128xf32, #tpu.memory_space<vmem>>, vector<16x128xf32>,
    return
  }
  func.func @transform_0(%arg0: i32) -> (i32, i32) {
    %c0_i32 = arith.constant 0 : i32
    %c0_i32_0 = arith.constant 0 : i32
    return %arg0, %c0_i32 : i32, i32
  }
  func.func @transform_1(%arg0: i32) -> (i32, i32) {
    %c0_i32 = arith.constant 0 : i32
    %c0_i32_0 = arith.constant 0 : i32
    return %arg0, %c0_i32 : i32, i32
  }
}

</mosaic_0001>

<llo_original>
// kernel: _mul2_jit.1
$region0: #{_mul2_jit.1}
  #allocation0 [shape = 'u32[]', space=smem, size = 0x4, offset = 0x4, fixed_abs, tag = 'smem constant byte address 0x4 - core index']
  #allocation1 [shape = 'u32[144,128]{1,0:T(1,128)}', space=vmem, size = 0x12000, scoped, tag = 'internal scratch']
  %s0 = inlined_call_operand.vmem [shape: f32[16,128], index: 0, kind: input, shape index: {}]
  %s1 = inlined_call_operand.vmem [shape: f32[16,128], index: 1, kind: output, shape index: {}]
  %s2 = sld [smem:[#allocation0]]
  $region14: #{_mul2_jit.1} parent=0
    _
  %s4 = ssub.s32 1, %s2
  %s5 = scalar_select 0, %s4, %s2
  // Predicated region
  $region2: #{_mul2_jit.1} parent=0 // pred_check
    _
  $region3: #{_mul2_jit.1} parent=0 // pred_check_branch
    %7 = sbr.rel (0) target = $region5
  $region4: #{_mul2_jit.1} parent=0 // pred_region
    _
  $region5: #{_mul2_jit.1} parent=0 // pred_fallthru
    _
  %v8 = vld [vmem:[%s0] sm:$0xff]
  %v9 = vld [vmem:[%s0 + $0x8] sm:$0xff]
  %v10 = vmul.f32 %v8, 2.0
  %v11 = vmul.f32 %v9, 2.0
  %12 = vst [vmem:[%s1] sm:$0xff] %v10
  %13 = vst [vmem:[%s1 + $0x8] sm:$0xff] %v11
  // Predicated region
  $region6: #{_mul2_jit.1} parent=0 // pred_check
    _
  $region7: #{_mul2_jit.1} parent=0 // pred_check_branch
    %15 = sbr.rel (0) target = $region9
  $region8: #{_mul2_jit.1} parent=0 // pred_region
    _
  $region9: #{_mul2_jit.1} parent=0 // pred_fallthru
    _
  // Predicated region
  $region10: #{_mul2_jit.1} parent=0 // pred_check
    _
  $region11: #{_mul2_jit.1} parent=0 // pred_check_branch
    %17 = sbr.rel (0) target = $region13
  $region12: #{_mul2_jit.1} parent=0 // pred_region
    _
  $region13: #{_mul2_jit.1} parent=0 // pred_fallthru
    _

</llo_original>
